<compile_context>
chip_gen: v7x
topology: tpu7x:2x2x1
jax: 0.10.0
libtpu: 0.0.40
codegen_flags: <defaults>
</compile_context>

<pallas_src>
import functools

import jax
import jax.numpy as jnp
from jax.experimental import pallas as pl
from jax.experimental.pallas import tpu as pltpu


def _round_up(a: int, b: int) -> int:
    return (a + b - 1) // b * b


def _choose_tile_b(batch: int) -> int:
    """Batch-tile selection.

    * batch < 64 : a single tile with minimal (16-row) padding.
    * batch >= 64: at least two grid steps so the "parallel" batch axis can be
      sharded across v7x's two TensorCores (harmless on v5e/v6e), tile capped at
      1024 rows (amortizes per-step overhead), sized from ceil(batch / n_tiles)
      so batch padding stays small at awkward batch sizes.
    """
    if batch < 64:
        return _round_up(batch, 16)
    n_tiles = max(2, pl.cdiv(batch, 1024))
    return _round_up(pl.cdiv(batch, n_tiles), 16)


def _mlp_kernel(x_ref, w1_ref, w2_ref, w3_ref, w4_ref, b_ref, o_ref):
    """Fused 4-layer MLP tile.

    bf16 matmuls on the MXU with f32 accumulation; bias/relu/sigmoid in f32
    (v5e-safe).  BatchNorm is pre-folded into (w, b); dropout is identity at
    inference.  The four bias rows arrive packed in a single (4, max_dim) operand.
    """
    h1 = w1_ref.shape[1]
    h2 = w2_ref.shape[1]
    h3 = w3_ref.shape[1]
    n4 = w4_ref.shape[1]

    x = x_ref[...].astype(jnp.bfloat16)            # in-kernel f32 -> bf16 cast

    # --- linear1 (+folded BN1) + relu ---
    h = jnp.dot(x, w1_ref[...], preferred_element_type=jnp.float32)
    h = jnp.maximum(h + b_ref[0:1, :h1], 0.0)

    # --- linear2 (+folded BN2) + relu ---
    h = jnp.dot(h.astype(jnp.bfloat16), w2_ref[...],
                preferred_element_type=jnp.float32)
    h = jnp.maximum(h + b_ref[1:2, :h2], 0.0)

    # --- linear3 (+folded BN3) + relu ---
    h = jnp.dot(h.astype(jnp.bfloat16), w3_ref[...],
                preferred_element_type=jnp.float32)
    h = jnp.maximum(h + b_ref[2:3, :h3], 0.0)

    # --- linear4 (lane-padded to a multiple of 128) + sigmoid ---
    logits = jnp.dot(h.astype(jnp.bfloat16), w4_ref[...],
                     preferred_element_type=jnp.float32)
    logits = logits + b_ref[3:4, :n4]
    sig = pl.reciprocal(1.0 + jnp.exp(-logits), approx=True)   # exp + rcp on the EUP
    o_ref[...] = sig.astype(o_ref.dtype)                       # lane-dense bf16 store


def prepare_params(params, eps: float = 1e-5):
    """One-time parameter prep (hoisted out of the per-call path).

    Folds BatchNorm into the preceding linear (w' = w*scale, b' = b*scale + shift),
    pads the final layer to a lane-dense multiple of 128 output columns, casts the
    MXU operands to bf16 and packs the four bias rows into one f32 array.
    """
    def fold(w, b, gamma, beta, mean, var):
        scale = gamma / jnp.sqrt(var + eps)
        return w * scale[None, :], b * scale + (beta - mean * scale)

    w1, b1 = fold(params["w1"], params["b1"], params["g1"], params["be1"],
                  params["mu1"], params["v1"])
    w2, b2 = fold(params["w2"], params["b2"], params["g2"], params["be2"],
                  params["mu2"], params["v2"])
    w3, b3 = fold(params["w3"], params["b3"], params["g3"], params["be3"],
                  params["mu3"], params["v3"])
    w4, b4 = params["w4"], params["b4"]

    n_classes = w4.shape[1]
    n_pad = _round_up(max(n_classes, 128), 128)          # lane-dense final layer
    w4 = jnp.pad(w4, ((0, 0), (0, n_pad - n_classes)))
    b4 = jnp.pad(b4, ((0, n_pad - n_classes),))

    dims = (b1.shape[0], b2.shape[0], b3.shape[0], n_pad)
    max_dim = _round_up(max(dims), 128)
    b_packed = jnp.zeros((4, max_dim), jnp.float32)
    for i, b in enumerate((b1, b2, b3, b4)):
        b_packed = b_packed.at[i, :b.shape[0]].set(b.astype(jnp.float32))

    return {
        "w1": w1.astype(jnp.bfloat16),
        "w2": w2.astype(jnp.bfloat16),
        "w3": w3.astype(jnp.bfloat16),
        "w4": w4.astype(jnp.bfloat16),
        "b": b_packed,
    }


@functools.partial(jax.jit, static_argnums=2)
def three_hidden_layers_forward(x, prepped, n_classes):
    """Single fused Pallas kernel call over batch tiles."""
    w1, w2, w3, w4 = prepped["w1"], prepped["w2"], prepped["w3"], prepped["w4"]
    b_packed = prepped["b"]

    batch, n_features = x.shape
    h1, h2, h3, n_pad = w1.shape[1], w2.shape[1], w3.shape[1], w4.shape[1]

    tile_b = _choose_tile_b(batch)
    b_pad = _round_up(batch, tile_b)
    if b_pad != batch:                                  # skip the pad when aligned
        x = jnp.pad(x, ((0, b_pad - batch), (0, 0)))
    grid = (b_pad // tile_b,)

    def resident(arr):   # constant block index -> fetched once, VMEM-resident
        return pl.BlockSpec(arr.shape, lambda i: (0,) * arr.ndim)

    in_specs = [
        pl.BlockSpec((tile_b, n_features), lambda i: (i, 0)),   # x tile (f32)
        resident(w1), resident(w2), resident(w3), resident(w4),
        resident(b_packed),
    ]
    out_spec = pl.BlockSpec((tile_b, n_pad), lambda i: (i, 0))

    flops = 2 * b_pad * (n_features * h1 + h1 * h2 + h2 * h3 + h3 * n_pad)
    bytes_accessed = (b_pad * n_features * 4
                      + (w1.size + w2.size + w3.size + w4.size) * 2
                      + b_packed.size * 4
                      + b_pad * n_pad * 2)
    cost = pl.CostEstimate(flops=flops,
                           transcendentals=2 * b_pad * n_pad,   # exp + reciprocal
                           bytes_accessed=bytes_accessed)

    out = pl.pallas_call(
        _mlp_kernel,
        out_shape=jax.ShapeDtypeStruct((b_pad, n_pad), jnp.bfloat16),
        grid=grid,
        in_specs=in_specs,
        out_specs=out_spec,
        compiler_params=pltpu.CompilerParams(
            dimension_semantics=("parallel",),
            vmem_limit_bytes=48 * 1024 * 1024,      # fits v7x 64 MiB with headroom
        ),
        cost_estimate=cost,
    )(x, w1, w2, w3, w4, b_packed)

    out = out[:batch, :n_classes].astype(jnp.float32)
    # PyTorch's preds.squeeze(-1): only squeezes when last dim == 1.
    if n_classes == 1:
        out = jnp.squeeze(out, axis=-1)
    return out


def init_params(key, n_features, n_classes, h1_in, h1_out, h2_out):
    """Deterministic synthetic parameter init (PyTorch-like uniform bounds)."""
    keys = jax.random.split(key, 20)
    ki = iter(range(20))

    def linear(fan_in, fan_out):
        bound = 1.0 / jnp.sqrt(fan_in)
        # stored as [in, out] (pre-transposed relative to torch's [out, in])
        w = jax.random.uniform(keys[next(ki)], (fan_in, fan_out),
                               jnp.float32, -bound, bound)
        b = jax.random.uniform(keys[next(ki)], (fan_out,),
                               jnp.float32, -bound, bound)
        return w, b

    def bn(dim):
        g = jax.random.uniform(keys[next(ki)], (dim,), jnp.float32, 0.5, 1.5)
        be = jax.random.uniform(keys[next(ki)], (dim,), jnp.float32, -0.1, 0.1)
        mu = jax.random.uniform(keys[next(ki)], (dim,), jnp.float32, -0.1, 0.1)
        v = jax.random.uniform(keys[next(ki)], (dim,), jnp.float32, 0.8, 1.2)
        return g, be, mu, v

    w1, b1 = linear(n_features, h1_in)
    g1, be1, mu1, v1 = bn(h1_in)
    w2, b2 = linear(h1_in, h1_out)
    g2, be2, mu2, v2 = bn(h1_out)
    w3, b3 = linear(h1_out, h2_out)
    g3, be3, mu3, v3 = bn(h2_out)
    w4, b4 = linear(h2_out, n_classes)

    return dict(w1=w1, b1=b1, g1=g1, be1=be1, mu1=mu1, v1=v1,
                w2=w2, b2=b2, g2=g2, be2=be2, mu2=mu2, v2=v2,
                w3=w3, b3=b3, g3=g3, be3=be3, mu3=mu3, v3=v3,
                w4=w4, b4=b4)


def _reference(x, params):
    """Pure-JAX f32 reference (matches the PyTorch module in eval mode)."""
    eps = 1e-5

    def bn(h, g, be, mu, v):
        return (h - mu) / jnp.sqrt(v + eps) * g + be

    h = x @ params["w1"] + params["b1"]
    h = jnp.maximum(bn(h, params["g1"], params["be1"], params["mu1"], params["v1"]), 0.0)
    h = h @ params["w2"] + params["b2"]
    h = jnp.maximum(bn(h, params["g2"], params["be2"], params["mu2"], params["v2"]), 0.0)
    h = h @ params["w3"] + params["b3"]
    h = jnp.maximum(bn(h, params["g3"], params["be3"], params["mu3"], params["v3"]), 0.0)
    logits = h @ params["w4"] + params["b4"]
    return jax.nn.sigmoid(logits)


if __name__ == "__main__":
    # Small shapes consistent with the module: batch=8, n_features=128,
    # hidden sizes 256/256/128, n_classes=8.
    B, N_FEATURES, N_CLASSES = 8, 128, 8
    H1_IN, H1_OUT, H2_OUT = 256, 256, 128

    key = jax.random.PRNGKey(0)
    kx, kp = jax.random.split(key)
    x = jax.random.normal(kx, (B, N_FEATURES), jnp.float32)
    params = init_params(kp, N_FEATURES, N_CLASSES, H1_IN, H1_OUT, H2_OUT)

    prepped = prepare_params(params)        # one-time setup (hoisted out of per-call path)
    out = three_hidden_layers_forward(x, prepped, N_CLASSES)
    out = jax.block_until_ready(out)

    ref = _reference(x, params)
    assert out.shape == (B, N_CLASSES), out.shape
    # bf16 MXU inputs + bf16 output + approx reciprocal -> loose (but comfortable)
    # tolerance on sigmoid outputs in [0, 1].
    max_err = float(jnp.max(jnp.abs(out - ref)))
    assert jnp.allclose(out, ref, atol=2e-2, rtol=2e-2), (
        "mismatch vs reference, max abs err = %g" % max_err)

    print("KERNEL_OK")
</pallas_src>

<mosaic_0001>
module attributes {stable_mosaic.version = 11 : i64} {
  func.func @_mlp_kernel(%arg0: i32, %arg1: memref<16x128xf32, #tpu.memory_space<vmem>>, %arg2: memref<128x256xbf16, #tpu.memory_space<vmem>>, %arg3: memref<256x256xbf16, #tpu.memory_space<vmem>>, %arg4: memref<256x128xbf16, #tpu.memory_space<vmem>>, %arg5: memref<128x128xbf16, #tpu.memory_space<vmem>>, %arg6: memref<4x256xf32, #tpu.memory_space<vmem>>, %arg7: memref<16x128xbf16, #tpu.memory_space<vmem>>) attributes {dimension_semantics = [#tpu.dimension_semantics<parallel>], iteration_bounds = array<i64: 1>, scalar_prefetch = 0 : i64, scratch_operands = 0 : i64, tpu.core_type = #tpu.core_type<tc>, window_params = [{transform_indices = @transform_0, window_bounds = array<i64: 16, 128>}, {pipeline_mode = #tpu.pipeline_mode<synchronous>, transform_indices = @transform_1, window_bounds = array<i64: 128, 256>}, {pipeline_mode = #tpu.pipeline_mode<synchronous>, transform_indices = @transform_2, window_bounds = array<i64: 256, 256>}, {pipeline_mode = #tpu.pipeline_mode<synchronous>, transform_indices = @transform_3, window_bounds = array<i64: 256, 128>}, {pipeline_mode = #tpu.pipeline_mode<synchronous>, transform_indices = @transform_4, window_bounds = array<i64: 128, 128>}, {pipeline_mode = #tpu.pipeline_mode<synchronous>, transform_indices = @transform_5, window_bounds = array<i64: 4, 256>}, {transform_indices = @transform_6, window_bounds = array<i64: 16, 128>}]} {
    %c0 = arith.constant 0 : index
    %c0_0 = arith.constant 0 : index
    %0 = vector.load %arg1[%c0, %c0_0] : memref<16x128xf32, #tpu.memory_space<vmem>>, vector<16x128xf32>
    %1 = arith.truncf %0 : vector<16x128xf32> to vector<16x128xbf16>
    %c0_1 = arith.constant 0 : index
    %c0_2 = arith.constant 0 : index
    %2 = vector.load %arg2[%c0_1, %c0_2] : memref<128x256xbf16, #tpu.memory_space<vmem>>, vector<128x256xbf16>
    %cst = arith.constant dense<0.000000e+00> : vector<16x256xf32>
    %3 = tpu.matmul %1, %2, %cst {dimension_numbers = #tpu.dot_dimension_numbers<[1], [0], [0], [1], [0, 0, 1, 1], [], []>} : vector<16x128xbf16>, vector<128x256xbf16>, vector<16x256xf32> -> vector<16x256xf32>
    %c0_3 = arith.constant 0 : index
    %c0_4 = arith.constant 0 : index
    %4 = vector.load %arg6[%c0_3, %c0_4] : memref<4x256xf32, #tpu.memory_space<vmem>>, vector<1x256xf32>
    %5 = vector.broadcast %4 : vector<1x256xf32> to vector<16x256xf32>
    %6 = arith.addf %3, %5 : vector<16x256xf32>
    %cst_5 = arith.constant 0.000000e+00 : f32
    %7 = vector.broadcast %cst_5 : f32 to vector<16x256xf32>
    %8 = arith.maximumf %6, %7 : vector<16x256xf32>
    %9 = arith.truncf %8 : vector<16x256xf32> to vector<16x256xbf16>
    %c0_6 = arith.constant 0 : index
    %c0_7 = arith.constant 0 : index
    %10 = vector.load %arg3[%c0_6, %c0_7] : memref<256x256xbf16, #tpu.memory_space<vmem>>, vector<256x256xbf16>
    %cst_8 = arith.constant dense<0.000000e+00> : vector<16x256xf32>
    %11 = tpu.matmul %9, %10, %cst_8 {dimension_numbers = #tpu.dot_dimension_numbers<[1], [0], [0], [1], [0, 0, 1, 1], [], []>} : vector<16x256xbf16>, vector<256x256xbf16>, vector<16x256xf32> -> vector<16x256xf32>
    %c1 = arith.constant 1 : index
    %c0_9 = arith.constant 0 : index
    %12 = vector.load %arg6[%c1, %c0_9] : memref<4x256xf32, #tpu.memory_space<vmem>>, vector<1x256xf32>
    %13 = vector.broadcast %12 : vector<1x256xf32> to vector<16x256xf32>
    %14 = arith.addf %11, %13 : vector<16x256xf32>
    %cst_10 = arith.constant 0.000000e+00 : f32
    %15 = vector.broadcast %cst_10 : f32 to vector<16x256xf32>
    %16 = arith.maximumf %14, %15 : vector<16x256xf32>
    %17 = arith.truncf %16 : vector<16x256xf32> to vector<16x256xbf16>
    %c0_11 = arith.constant 0 : index
    %c0_12 = arith.constant 0 : index
    %18 = vector.load %arg4[%c0_11, %c0_12] : memref<256x128xbf16, #tpu.memory_space<vmem>>, vector<256x128xbf16>
    %cst_13 = arith.constant dense<0.000000e+00> : vector<16x128xf32>
    %19 = tpu.matmul %17, %18, %cst_13 {dimension_numbers = #tpu.dot_dimension_numbers<[1], [0], [0], [1], [0, 0, 1, 1], [], []>} : vector<16x256xbf16>, vector<256x128xbf16>, vector<16x128xf32> -> vector<16x128xf32>
    %c2 = arith.constant 2 : index
    %c0_14 = arith.constant 0 : index
    %20 = vector.load %arg6[%c2, %c0_14] : memref<4x256xf32, #tpu.memory_space<vmem>>, vector<1x128xf32>
    %21 = vector.broadcast %20 : vector<1x128xf32> to vector<16x128xf32>
    %22 = arith.addf %19, %21 : vector<16x128xf32>
    %cst_15 = arith.constant 0.000000e+00 : f32
    %23 = vector.broadcast %cst_15 : f32 to vector<16x128xf32>
    %24 = arith.maximumf %22, %23 : vector<16x128xf32>
    %25 = arith.truncf %24 : vector<16x128xf32> to vector<16x128xbf16>
    %c0_16 = arith.constant 0 : index
    %c0_17 = arith.constant 0 : index
    %26 = vector.load %arg5[%c0_16, %c0_17] : memref<128x128xbf16, #tpu.memory_space<vmem>>, vector<128x128xbf16>
    %cst_18 = arith.constant dense<0.000000e+00> : vector<16x128xf32>
    %27 = tpu.matmul %25, %26, %cst_18 {dimension_numbers = #tpu.dot_dimension_numbers<[1], [0], [0], [1], [0, 0, 1, 1], [], []>} : vector<16x128xbf16>, vector<128x128xbf16>, vector<16x128xf32> -> vector<16x128xf32>
    %c3 = arith.constant 3 : index
    %c0_19 = arith.constant 0 : index
    %28 = vector.load %arg6[%c3, %c0_19] : memref<4x256xf32, #tpu.memory_space<vmem>>, vector<1x128xf32>
    %29 = vector.broadcast %28 : vector<1x128xf32> to vector<16x128xf32>
    %30 = arith.addf %27, %29 : vector<16x128xf32>
    %cst_20 = arith.constant 0.000000e+00 : f32
    %31 = vector.broadcast %cst_20 : f32 to vector<16x128xf32>
    %32 = arith.subf %31, %30 : vector<16x128xf32>
    %33 = math.exp %32 : vector<16x128xf32>
    %cst_21 = arith.constant 1.000000e+00 : f32
    %34 = vector.broadcast %cst_21 : f32 to vector<16x128xf32>
    %35 = arith.addf %34, %33 : vector<16x128xf32>
    %36 = tpu.reciprocal %35 {approx = true} : vector<16x128xf32> -> vector<16x128xf32>
    %37 = arith.truncf %36 : vector<16x128xf32> to vector<16x128xbf16>
    %c0_22 = arith.constant 0 : index
    %c0_23 = arith.constant 0 : index
    %38 = vector.load %arg7[%c0_22, %c0_23] : memref<16x128xbf16, #tpu.memory_space<vmem>>, vector<16x128xbf16>
    tpu.vector_store %arg7[%c0_22, %c0_23], %37 {strides = array<i32>} : memref<16x128xbf16, #tpu.memory_space<vmem>>, vector<16x128xbf16>,
    return
  }
  func.func @transform_0(%arg0: i32) -> (i32, i32) {
    %c0_i32 = arith.constant 0 : i32
    %c0_i32_0 = arith.constant 0 : i32
    return %arg0, %c0_i32 : i32, i32
  }
  func.func @transform_1(%arg0: i32) -> (i32, i32) {
    %c0_i32 = arith.constant 0 : i32
    %c0_i32_0 = arith.constant 0 : i32
    %c0_i32_1 = arith.constant 0 : i32
    return %c0_i32, %c0_i32_0 : i32, i32
  }
  func.func @transform_2(%arg0: i32) -> (i32, i32) {
    %c0_i32 = arith.constant 0 : i32
    %c0_i32_0 = arith.constant 0 : i32
    %c0_i32_1 = arith.constant 0 : i32
    return %c0_i32, %c0_i32_0 : i32, i32
  }
  func.func @transform_3(%arg0: i32) -> (i32, i32) {
    %c0_i32 = arith.constant 0 : i32
    %c0_i32_0 = arith.constant 0 : i32
    %c0_i32_1 = arith.constant 0 : i32
    return %c0_i32, %c0_i32_0 : i32, i32
  }
  func.func @transform_4(%arg0: i32) -> (i32, i32) {
    %c0_i32 = arith.constant 0 : i32
    %c0_i32_0 = arith.constant 0 : i32
    %c0_i32_1 = arith.constant 0 : i32
    return %c0_i32, %c0_i32_0 : i32, i32
  }
  func.func @transform_5(%arg0: i32) -> (i32, i32) {
    %c0_i32 = arith.constant 0 : i32
    %c0_i32_0 = arith.constant 0 : i32
    %c0_i32_1 = arith.constant 0 : i32
    return %c0_i32, %c0_i32_0 : i32, i32
  }
  func.func @transform_6(%arg0: i32) -> (i32, i32) {
    %c0_i32 = arith.constant 0 : i32
    %c0_i32_0 = arith.constant 0 : i32
    return %arg0, %c0_i32 : i32, i32
  }
}

</mosaic_0001>

<llo_original>
// kernel: three_hidden_layers_forward.1
$region0: #{three_hidden_layers_forward.1}
  #allocation0 [shape = 'u32[]', space=smem, size = 0x4, offset = 0x4, fixed_abs, tag = 'smem constant byte address 0x4 - core index']
  #allocation1 [shape = 'u32[144,128]{1,0:T(1,128)}', space=vmem, size = 0x12000, scoped, tag = 'internal scratch']
  %s0 = inlined_call_operand.vmem [shape: f32[16,128], index: 0, kind: input, shape index: {}]
  %s1 = inlined_call_operand.hbm [shape: bf16[128,256], index: 1, kind: input, shape index: {}]
  %s2 = inlined_call_operand.hbm [shape: bf16[256,256], index: 2, kind: input, shape index: {}]
  %s3 = inlined_call_operand.hbm [shape: bf16[256,128], index: 3, kind: input, shape index: {}]
  %s4 = inlined_call_operand.hbm [shape: bf16[128,128], index: 4, kind: input, shape index: {}]
  %s5 = inlined_call_operand.vmem [shape: f32[4,256], index: 5, kind: input, shape index: {}]
  %s6 = inlined_call_operand.vmem [shape: bf16[16,128], index: 6, kind: output, shape index: {}]
  %s7 = sld [smem:[#allocation0]]
  $region50: #{three_hidden_layers_forward.1} parent=0
    _
  %s9 = ssub.s32 1, %s7
  %s10 = scalar_select 0, %s9, %s7
  $region1: #{three_hidden_layers_forward.1} parent=0
    #allocation2 [shape = 'u8[65536]{0}', space=vmem, size = 0x10000, scoped, tag = 'input window, operand 1, single buffered']
    #allocation3 [shape = 's32[1]{0}', space=sflag, size = 0x4, scoped, tag = 'scoped memory for three_hidden_layers_forward.1']
    #allocation4 [shape = 'u8[131072]{0}', space=vmem, size = 0x20000, scoped, tag = 'input window, operand 2, single buffered']
    #allocation5 [shape = 's32[1]{0}', space=sflag, size = 0x4, scoped, tag = 'scoped memory for three_hidden_layers_forward.1']
    #allocation6 [shape = 'u8[65536]{0}', space=vmem, size = 0x10000, scoped, tag = 'input window, operand 3, single buffered']
    #allocation7 [shape = 'u8[32768]{0}', space=vmem, size = 0x8000, scoped, tag = 'input window, operand 4, single buffered']
    #allocation8 [shape = 's32[1]{0}', space=sflag, size = 0x4, scoped, tag = 'scoped memory for three_hidden_layers_forward.1']
    %11 = vsyncpa [#allocation3], 0
    %12 = vsyncpa [#allocation5], 0
    %13 = vsyncpa [#allocation8], 0
    // Predicated region
    $region2: #{three_hidden_layers_forward.1} parent=1 // pred_check
      _
    $region3: #{three_hidden_layers_forward.1} parent=1 // pred_check_branch
      %15 = sbr.rel (0) target = $region5
    $region4: #{three_hidden_layers_forward.1} parent=1 // pred_region
      _
    $region5: #{three_hidden_layers_forward.1} parent=1 // pred_fallthru
      _
    // Predicated region
    $region6: #{three_hidden_layers_forward.1} parent=1 // pred_check
      _
    $region7: #{three_hidden_layers_forward.1} parent=1 // pred_check_branch
      %17 = sbr.rel (0) target = $region9
    $region8: #{three_hidden_layers_forward.1} parent=1 // pred_region
      %s19 = ssub.s32 2048, 2048
      %20 = vsyncadd [#allocation3], %s19
      %s21 = sshll.u32 [#allocation2], 4
      %s22 = int_to_ptr.vmem [resolvable:$true] %s21
      %27 = dma.hbm_to_vmem [thread:$0]  %s1, 2048, %s22, [#allocation3], 128, 128, 8
    $region9: #{three_hidden_layers_forward.1} parent=1 // pred_fallthru
      _
    // Predicated region
    $region10: #{three_hidden_layers_forward.1} parent=1 // pred_check
      _
    $region11: #{three_hidden_layers_forward.1} parent=1 // pred_check_branch
      %29 = sbr.rel (0) target = $region13
    $region12: #{three_hidden_layers_forward.1} parent=1 // pred_region
      %s31 = ssub.s32 4096, 4096
      %32 = vsyncadd [#allocation5], %s31
      %s33 = sshll.u32 [#allocation4], 4
      %s34 = int_to_ptr.vmem [resolvable:$true] %s33
      %39 = dma.hbm_to_vmem [thread:$0]  %s2, 4096, %s34, [#allocation5], 128, 128, 8
    $region13: #{three_hidden_layers_forward.1} parent=1 // pred_fallthru
      _
    // Predicated region
    $region14: #{three_hidden_layers_forward.1} parent=1 // pred_check
      _
    $region15: #{three_hidden_layers_forward.1} parent=1 // pred_check_branch
      %41 = sbr.rel (0) target = $region17
    $region16: #{three_hidden_layers_forward.1} parent=1 // pred_region
      %s43 = ssub.s32 2048, 2048
      %44 = vsyncadd [#allocation5], %s43
      %s45 = sshll.u32 [#allocation6], 4
      %s46 = int_to_ptr.vmem [resolvable:$true] %s45
      %51 = dma.hbm_to_vmem [thread:$0]  %s3, 2048, %s46, [#allocation5], 64, 64, 4
    $region17: #{three_hidden_layers_forward.1} parent=1 // pred_fallthru
      _
    // Predicated region
    $region18: #{three_hidden_layers_forward.1} parent=1 // pred_check
      _
    $region19: #{three_hidden_layers_forward.1} parent=1 // pred_check_branch
      %53 = sbr.rel (0) target = $region21
    $region20: #{three_hidden_layers_forward.1} parent=1 // pred_region
      %s55 = ssub.s32 1024, 1024
      %56 = vsyncadd [#allocation8], %s55
      %s57 = sshll.u32 [#allocation7], 4
      %s58 = int_to_ptr.vmem [resolvable:$true] %s57
      %63 = dma.hbm_to_vmem [thread:$0]  %s4, 1024, %s58, [#allocation8], 64, 64, 4
    $region21: #{three_hidden_layers_forward.1} parent=1 // pred_fallthru
      _
    // Predicated region
    $region22: #{three_hidden_layers_forward.1} parent=1 // pred_check
      _
    $region23: #{three_hidden_layers_forward.1} parent=1 // pred_check_branch
      %65 = sbr.rel (0) target = $region25
    $region24: #{three_hidden_layers_forward.1} parent=1 // pred_region
      _
    $region25: #{three_hidden_layers_forward.1} parent=1 // pred_fallthru
      _
    // Predicated region
    $region26: #{three_hidden_layers_forward.1} parent=1 // pred_check
      _
    $region27: #{three_hidden_layers_forward.1} parent=1 // pred_check_branch
      %67 = sbr.rel (0) target = $region29
    $region28: #{three_hidden_layers_forward.1} parent=1 // pred_region
      %68 = dma.done [#allocation3], 2048
    $region29: #{three_hidden_layers_forward.1} parent=1 // pred_fallthru
      _
    // Predicated region
    $region30: #{three_hidden_layers_forward.1} parent=1 // pred_check
      _
    $region31: #{three_hidden_layers_forward.1} parent=1 // pred_check_branch
      %70 = sbr.rel (0) target = $region33
    $region32: #{three_hidden_layers_forward.1} parent=1 // pred_region
      %71 = dma.done [#allocation5], 4096
    $region33: #{three_hidden_layers_forward.1} parent=1 // pred_fallthru
      _
    // Predicated region
    $region34: #{three_hidden_layers_forward.1} parent=1 // pred_check
      _
    $region35: #{three_hidden_layers_forward.1} parent=1 // pred_check_branch
      %73 = sbr.rel (0) target = $region37
    $region36: #{three_hidden_layers_forward.1} parent=1 // pred_region
      %74 = dma.done [#allocation5], 2048
    $region37: #{three_hidden_layers_forward.1} parent=1 // pred_fallthru
      _
    // Predicated region
    $region38: #{three_hidden_layers_forward.1} parent=1 // pred_check
      _
    $region39: #{three_hidden_layers_forward.1} parent=1 // pred_check_branch
      %76 = sbr.rel (0) target = $region41
    $region40: #{three_hidden_layers_forward.1} parent=1 // pred_region
      %77 = dma.done [#allocation8], 1024
    $region41: #{three_hidden_layers_forward.1} parent=1 // pred_fallthru
      _
    %v79 = vld [vmem:[%s0] sm:$0xff]
    %v80 = vld [vmem:[%s0 + $0x8] sm:$0xff]
    %v81 = vpack.c.bf16 %v80, %v79
    %v82 = vld [vmem:[#allocation2] sm:$0xff]
    %v83 = vld [vmem:[#allocation2 + $0x8] sm:$0xff]
    %v84 = vld [vmem:[#allocation2 + $0x10] sm:$0xff]
    %v85 = vld [vmem:[#allocation2 + $0x18] sm:$0xff]
    %v86 = vld [vmem:[#allocation2 + $0x20] sm:$0xff]
    %v87 = vld [vmem:[#allocation2 + $0x28] sm:$0xff]
    %v88 = vld [vmem:[#allocation2 + $0x30] sm:$0xff]
    %v89 = vld [vmem:[#allocation2 + $0x38] sm:$0xff]
    %v90 = vld [vmem:[#allocation2 + $0x40] sm:$0xff]
    %v91 = vld [vmem:[#allocation2 + $0x48] sm:$0xff]
    %v92 = vld [vmem:[#allocation2 + $0x50] sm:$0xff]
    %v93 = vld [vmem:[#allocation2 + $0x58] sm:$0xff]
    %v94 = vld [vmem:[#allocation2 + $0x60] sm:$0xff]
    %v95 = vld [vmem:[#allocation2 + $0x68] sm:$0xff]
    %v96 = vld [vmem:[#allocation2 + $0x70] sm:$0xff]
    %v97 = vld [vmem:[#allocation2 + $0x78] sm:$0xff]
    %v98 = vld [vmem:[%s5] ss:$4 sm:$0x3]
    %v100 = vlaneseq
    %v101 = vshrl.u32 %v100, 7
    %v102 = vsub.s32 0, %v101
    %v103 = vrot.slane %v98, %v102
    %v104 = vlaneseq
    %v105 = vshrl.u32 %v104, 7
    %v106 = vsub.s32 1, %v105
    %v107 = vrot.slane %v98, %v106
    %v126 = vunpack.c.l.b16 %v82
    %v127 = vunpack.c.h.b16 %v82
    %v128 = vunpack.c.l.b16 %v83
    %v129 = vunpack.c.h.b16 %v83
    %v130 = vunpack.c.l.b16 %v84
    %v131 = vunpack.c.h.b16 %v84
    %v132 = vunpack.c.l.b16 %v85
    %v133 = vunpack.c.h.b16 %v85
    %v134 = vunpack.c.l.b16 %v86
    %v135 = vunpack.c.h.b16 %v86
    %v136 = vunpack.c.l.b16 %v87
    %v137 = vunpack.c.h.b16 %v87
    %v138 = vunpack.c.l.b16 %v88
    %v139 = vunpack.c.h.b16 %v88
    %v140 = vunpack.c.l.b16 %v89
    %v141 = vunpack.c.h.b16 %v89
    %v142 = vunpack.c.l.b16 %v90
    %v143 = vunpack.c.h.b16 %v90
    %v144 = vunpack.c.l.b16 %v91
    %v145 = vunpack.c.h.b16 %v91
    %v146 = vunpack.c.l.b16 %v92
    %v147 = vunpack.c.h.b16 %v92
    %v148 = vunpack.c.l.b16 %v93
    %v149 = vunpack.c.h.b16 %v93
    %v150 = vunpack.c.l.b16 %v94
    %v151 = vunpack.c.h.b16 %v94
    %v152 = vunpack.c.l.b16 %v95
    %v153 = vunpack.c.h.b16 %v95
    %v154 = vunpack.c.l.b16 %v96
    %v155 = vunpack.c.h.b16 %v96
    %v156 = vunpack.c.l.b16 %v97
    %v157 = vunpack.c.h.b16 %v97
    %v158 = vpack.c.b16 %v128, %v126
    %v159 = vpack.c.b16 %v129, %v127
    %v160 = vpack.c.b16 %v132, %v130
    %v161 = vpack.c.b16 %v133, %v131
    %v162 = vpack.c.b16 %v136, %v134
    %v163 = vpack.c.b16 %v137, %v135
    %v164 = vpack.c.b16 %v140, %v138
    %v165 = vpack.c.b16 %v141, %v139
    %v166 = vpack.c.b16 %v144, %v142
    %v167 = vpack.c.b16 %v145, %v143
    %v168 = vpack.c.b16 %v148, %v146
    %v169 = vpack.c.b16 %v149, %v147
    %v170 = vpack.c.b16 %v152, %v150
    %v171 = vpack.c.b16 %v153, %v151
    %v172 = vpack.c.b16 %v156, %v154
    %v173 = vpack.c.b16 %v157, %v155
    %190 = vmatprep.subr.bf16.mxu0 %v159
    %191 = vmatpush1.bf16.msra.mxu0 %v158
    %192 = vmatprep.subr.bf16.mxu0 %v161
    %193 = vmatpush1.bf16.msra.mxu0 %v160
    %194 = vmatprep.subr.bf16.mxu0 %v163
    %195 = vmatpush1.bf16.msra.mxu0 %v162
    %196 = vmatprep.subr.bf16.mxu0 %v165
    %197 = vmatpush1.bf16.msra.mxu0 %v164
    %198 = vmatprep.subr.bf16.mxu0 %v167
    %199 = vmatpush1.bf16.msra.mxu0 %v166
    %200 = vmatprep.subr.bf16.mxu0 %v169
    %201 = vmatpush1.bf16.msra.mxu0 %v168
    %202 = vmatprep.subr.bf16.mxu0 %v171
    %203 = vmatpush1.bf16.msra.mxu0 %v170
    %204 = vmatprep.subr.bf16.mxu0 %v173
    %205 = vmatpush1.bf16.msra.mxu0 %v172
    %206 = vmatprep.subr.bf16.mxu0 0
    %207 = vmatpush1.bf16.msra.mxu0 0
    %208 = vmatprep.subr.bf16.mxu0 0
    %209 = vmatpush1.bf16.msra.mxu0 0
    %210 = vmatprep.subr.bf16.mxu0 0
    %211 = vmatpush1.bf16.msra.mxu0 0
    %212 = vmatprep.subr.bf16.mxu0 0
    %213 = vmatpush1.bf16.msra.mxu0 0
    %214 = vmatprep.subr.bf16.mxu0 0
    %215 = vmatpush1.bf16.msra.mxu0 0
    %216 = vmatprep.subr.bf16.mxu0 0
    %217 = vmatpush1.bf16.msra.mxu0 0
    %218 = vmatprep.subr.bf16.mxu0 0
    %219 = vmatpush1.bf16.msra.mxu0 0
    %220 = vmatprep.subr.bf16.mxu0 0
    %221 = vmatpush1.bf16.msra.mxu0 0
    %222 = vmatprep.mubr.bf16.mxu0 0
    %223 = vmatmul.mubr.bf16.gmra.mrb[0].mxu0 %v81
    %v224 = vpop.f32.mrb[0].mxu0
    %v225 = vadd.f32 %v103, %v224
    %v226 = vpop.f32.mrb[0].mxu0
    %v227 = vadd.f32 %v107, %v226
    %v228 = vpop.f32.mrb[0].mxu0
    %v229 = vadd.f32 %v103, %v228
    %v230 = vpop.f32.mrb[0].mxu0
    %v231 = vadd.f32 %v107, %v230
    %232 = vdwg.mxu0
    %v233 = vmax.f32 %v225, 0.0
    %v234 = vmax.f32 %v227, 0.0
    %v235 = vmax.f32 %v229, 0.0
    %v236 = vmax.f32 %v231, 0.0
    %v237 = vpack.c.bf16 %v235, %v233
    %v238 = vpack.c.bf16 %v236, %v234
    %v239 = vld [vmem:[#allocation4] sm:$0xff]
    %v240 = vld [vmem:[#allocation4 + $0x8] sm:$0xff]
    %v241 = vld [vmem:[#allocation4 + $0x10] sm:$0xff]
    %v242 = vld [vmem:[#allocation4 + $0x18] sm:$0xff]
    %v243 = vld [vmem:[#allocation4 + $0x20] sm:$0xff]
    %v244 = vld [vmem:[#allocation4 + $0x28] sm:$0xff]
    %v245 = vld [vmem:[#allocation4 + $0x30] sm:$0xff]
    %v246 = vld [vmem:[#allocation4 + $0x38] sm:$0xff]
    %v247 = vld [vmem:[#allocation4 + $0x40] sm:$0xff]
    %v248 = vld [vmem:[#allocation4 + $0x48] sm:$0xff]
    %v249 = vld [vmem:[#allocation4 + $0x50] sm:$0xff]
    %v250 = vld [vmem:[#allocation4 + $0x58] sm:$0xff]
    %v251 = vld [vmem:[#allocation4 + $0x60] sm:$0xff]
    %v252 = vld [vmem:[#allocation4 + $0x68] sm:$0xff]
    %v253 = vld [vmem:[#allocation4 + $0x70] sm:$0xff]
    %v254 = vld [vmem:[#allocation4 + $0x78] sm:$0xff]
    %v255 = vld [vmem:[#allocation4 + $0x80] sm:$0xff]
    %v256 = vld [vmem:[#allocation4 + $0x88] sm:$0xff]
    %v257 = vld [vmem:[#allocation4 + $0x90] sm:$0xff]
    %v258 = vld [vmem:[#allocation4 + $0x98] sm:$0xff]
    %v259 = vld [vmem:[#allocation4 + $0xa0] sm:$0xff]
    %v260 = vld [vmem:[#allocation4 + $0xa8] sm:$0xff]
    %v261 = vld [vmem:[#allocation4 + $0xb0] sm:$0xff]
    %v262 = vld [vmem:[#allocation4 + $0xb8] sm:$0xff]
    %v263 = vld [vmem:[#allocation4 + $0xc0] sm:$0xff]
    %v264 = vld [vmem:[#allocation4 + $0xc8] sm:$0xff]
    %v265 = vld [vmem:[#allocation4 + $0xd0] sm:$0xff]
    %v266 = vld [vmem:[#allocation4 + $0xd8] sm:$0xff]
    %v267 = vld [vmem:[#allocation4 + $0xe0] sm:$0xff]
    %v268 = vld [vmem:[#allocation4 + $0xe8] sm:$0xff]
    %v269 = vld [vmem:[#allocation4 + $0xf0] sm:$0xff]
    %v270 = vld [vmem:[#allocation4 + $0xf8] sm:$0xff]
    %s271 = scalar_lea.vmem %s5, 1
    %v272 = vld [vmem:[%s271] ss:$4 sm:$0x3]
    %v274 = vlaneseq
    %v275 = vshrl.u32 %v274, 7
    %v276 = vsub.s32 0, %v275
    %v277 = vrot.slane %v272, %v276
    %v278 = vlaneseq
    %v279 = vshrl.u32 %v278, 7
    %v280 = vsub.s32 1, %v279
    %v281 = vrot.slane %v272, %v280
    %v316 = vunpack.c.l.b16 %v239
    %v317 = vunpack.c.h.b16 %v239
    %v318 = vunpack.c.l.b16 %v240
    %v319 = vunpack.c.h.b16 %v240
    %v320 = vunpack.c.l.b16 %v241
    %v321 = vunpack.c.h.b16 %v241
    %v322 = vunpack.c.l.b16 %v242
    %v323 = vunpack.c.h.b16 %v242
    %v324 = vunpack.c.l.b16 %v243
    %v325 = vunpack.c.h.b16 %v243
    %v326 = vunpack.c.l.b16 %v244
    %v327 = vunpack.c.h.b16 %v244
    %v328 = vunpack.c.l.b16 %v245
    %v329 = vunpack.c.h.b16 %v245
    %v330 = vunpack.c.l.b16 %v246
    %v331 = vunpack.c.h.b16 %v246
    %v332 = vunpack.c.l.b16 %v247
    %v333 = vunpack.c.h.b16 %v247
    %v334 = vunpack.c.l.b16 %v248
    %v335 = vunpack.c.h.b16 %v248
    %v336 = vunpack.c.l.b16 %v249
    %v337 = vunpack.c.h.b16 %v249
    %v338 = vunpack.c.l.b16 %v250
    %v339 = vunpack.c.h.b16 %v250
    %v340 = vunpack.c.l.b16 %v251
    %v341 = vunpack.c.h.b16 %v251
    %v342 = vunpack.c.l.b16 %v252
    %v343 = vunpack.c.h.b16 %v252
    %v344 = vunpack.c.l.b16 %v253
    %v345 = vunpack.c.h.b16 %v253
    %v346 = vunpack.c.l.b16 %v254
    %v347 = vunpack.c.h.b16 %v254
    %v348 = vunpack.c.l.b16 %v255
    %v349 = vunpack.c.h.b16 %v255
    %v350 = vunpack.c.l.b16 %v256
    %v351 = vunpack.c.h.b16 %v256
    %v352 = vunpack.c.l.b16 %v257
    %v353 = vunpack.c.h.b16 %v257
    %v354 = vunpack.c.l.b16 %v258
    %v355 = vunpack.c.h.b16 %v258
    %v356 = vunpack.c.l.b16 %v259
    %v357 = vunpack.c.h.b16 %v259
    %v358 = vunpack.c.l.b16 %v260
    %v359 = vunpack.c.h.b16 %v260
    %v360 = vunpack.c.l.b16 %v261
    %v361 = vunpack.c.h.b16 %v261
    %v362 = vunpack.c.l.b16 %v262
    %v363 = vunpack.c.h.b16 %v262
    %v364 = vunpack.c.l.b16 %v263
    %v365 = vunpack.c.h.b16 %v263
    %v366 = vunpack.c.l.b16 %v264
    %v367 = vunpack.c.h.b16 %v264
    %v368 = vunpack.c.l.b16 %v265
    %v369 = vunpack.c.h.b16 %v265
    %v370 = vunpack.c.l.b16 %v266
    %v371 = vunpack.c.h.b16 %v266
    %v372 = vunpack.c.l.b16 %v267
    %v373 = vunpack.c.h.b16 %v267
    %v374 = vunpack.c.l.b16 %v268
    %v375 = vunpack.c.h.b16 %v268
    %v376 = vunpack.c.l.b16 %v269
    %v377 = vunpack.c.h.b16 %v269
    %v378 = vunpack.c.l.b16 %v270
    %v379 = vunpack.c.h.b16 %v270
    %v380 = vpack.c.b16 %v318, %v316
    %v381 = vpack.c.b16 %v319, %v317
    %v382 = vpack.c.b16 %v322, %v320
    %v383 = vpack.c.b16 %v323, %v321
    %v384 = vpack.c.b16 %v326, %v324
    %v385 = vpack.c.b16 %v327, %v325
    %v386 = vpack.c.b16 %v330, %v328
    %v387 = vpack.c.b16 %v331, %v329
    %v388 = vpack.c.b16 %v334, %v332
    %v389 = vpack.c.b16 %v335, %v333
    %v390 = vpack.c.b16 %v338, %v336
    %v391 = vpack.c.b16 %v339, %v337
    %v392 = vpack.c.b16 %v342, %v340
    %v393 = vpack.c.b16 %v343, %v341
    %v394 = vpack.c.b16 %v346, %v344
    %v395 = vpack.c.b16 %v347, %v345
    %v396 = vpack.c.b16 %v350, %v348
    %v397 = vpack.c.b16 %v351, %v349
    %v398 = vpack.c.b16 %v354, %v352
    %v399 = vpack.c.b16 %v355, %v353
    %v400 = vpack.c.b16 %v358, %v356
    %v401 = vpack.c.b16 %v359, %v357
    %v402 = vpack.c.b16 %v362, %v360
    %v403 = vpack.c.b16 %v363, %v361
    %v404 = vpack.c.b16 %v366, %v364
    %v405 = vpack.c.b16 %v367, %v365
    %v406 = vpack.c.b16 %v370, %v368
    %v407 = vpack.c.b16 %v371, %v369
    %v408 = vpack.c.b16 %v374, %v372
    %v409 = vpack.c.b16 %v375, %v373
    %v410 = vpack.c.b16 %v378, %v376
    %v411 = vpack.c.b16 %v379, %v377
    %444 = vmatprep.subr.bf16.mxu0 %v381
    %445 = vmatpush1.bf16.msra.mxu0 %v380
    %446 = vmatprep.subr.bf16.mxu0 %v383
    %447 = vmatpush1.bf16.msra.mxu0 %v382
    %448 = vmatprep.subr.bf16.mxu0 %v385
    %449 = vmatpush1.bf16.msra.mxu0 %v384
    %450 = vmatprep.subr.bf16.mxu0 %v387
    %451 = vmatpush1.bf16.msra.mxu0 %v386
    %452 = vmatprep.subr.bf16.mxu0 %v389
    %453 = vmatpush1.bf16.msra.mxu0 %v388
    %454 = vmatprep.subr.bf16.mxu0 %v391
    %455 = vmatpush1.bf16.msra.mxu0 %v390
    %456 = vmatprep.subr.bf16.mxu0 %v393
    %457 = vmatpush1.bf16.msra.mxu0 %v392
    %458 = vmatprep.subr.bf16.mxu0 %v395
    %459 = vmatpush1.bf16.msra.mxu0 %v394
    %460 = vmatprep.subr.bf16.mxu0 %v397
    %461 = vmatpush1.bf16.msra.mxu0 %v396
    %462 = vmatprep.subr.bf16.mxu0 %v399
    %463 = vmatpush1.bf16.msra.mxu0 %v398
    %464 = vmatprep.subr.bf16.mxu0 %v401
    %465 = vmatpush1.bf16.msra.mxu0 %v400
    %466 = vmatprep.subr.bf16.mxu0 %v403
    %467 = vmatpush1.bf16.msra.mxu0 %v402
    %468 = vmatprep.subr.bf16.mxu0 %v405
    %469 = vmatpush1.bf16.msra.mxu0 %v404
    %470 = vmatprep.subr.bf16.mxu0 %v407
    %471 = vmatpush1.bf16.msra.mxu0 %v406
    %472 = vmatprep.subr.bf16.mxu0 %v409
    %473 = vmatpush1.bf16.msra.mxu0 %v408
    %474 = vmatprep.subr.bf16.mxu0 %v411
    %475 = vmatpush1.bf16.msra.mxu0 %v410
    %476 = vmatprep.mubr.bf16.mxu0 %v238
    %477 = vmatmul.mubr.bf16.gmra.mrb[0].mxu0 %v237
    %v478 = vpop.f32.mrb[0].mxu0
    %v479 = vadd.f32 %v277, %v478
    %v480 = vpop.f32.mrb[0].mxu0
    %v481 = vadd.f32 %v281, %v480
    %v482 = vpop.f32.mrb[0].mxu0
    %v483 = vadd.f32 %v277, %v482
    %v484 = vpop.f32.mrb[0].mxu0
    %v485 = vadd.f32 %v281, %v484
    %486 = vdwg.mxu0
    %v487 = vmax.f32 %v479, 0.0
    %v488 = vmax.f32 %v481, 0.0
    %v489 = vmax.f32 %v483, 0.0
    %v490 = vmax.f32 %v485, 0.0
    %v491 = vpack.c.bf16 %v489, %v487
    %v492 = vpack.c.bf16 %v490, %v488
    %v493 = vld [vmem:[#allocation6] sm:$0xf]
    %v494 = vld [vmem:[#allocation6 + $0x4] sm:$0xf]
    %v495 = vld [vmem:[#allocation6 + $0x8] sm:$0xf]
    %v496 = vld [vmem:[#allocation6 + $0xc] sm:$0xf]
    %v497 = vld [vmem:[#allocation6 + $0x10] sm:$0xf]
    %v498 = vld [vmem:[#allocation6 + $0x14] sm:$0xf]
    %v499 = vld [vmem:[#allocation6 + $0x18] sm:$0xf]
    %v500 = vld [vmem:[#allocation6 + $0x1c] sm:$0xf]
    %v501 = vld [vmem:[#allocation6 + $0x20] sm:$0xf]
    %v502 = vld [vmem:[#allocation6 + $0x24] sm:$0xf]
    %v503 = vld [vmem:[#allocation6 + $0x28] sm:$0xf]
    %v504 = vld [vmem:[#allocation6 + $0x2c] sm:$0xf]
    %v505 = vld [vmem:[#allocation6 + $0x30] sm:$0xf]
    %v506 = vld [vmem:[#allocation6 + $0x34] sm:$0xf]
    %v507 = vld [vmem:[#allocation6 + $0x38] sm:$0xf]
    %v508 = vld [vmem:[#allocation6 + $0x3c] sm:$0xf]
    %v509 = vld [vmem:[#allocation6 + $0x40] sm:$0xf]
    %v510 = vld [vmem:[#allocation6 + $0x44] sm:$0xf]
    %v511 = vld [vmem:[#allocation6 + $0x48] sm:$0xf]
    %v512 = vld [vmem:[#allocation6 + $0x4c] sm:$0xf]
    %v513 = vld [vmem:[#allocation6 + $0x50] sm:$0xf]
    %v514 = vld [vmem:[#allocation6 + $0x54] sm:$0xf]
    %v515 = vld [vmem:[#allocation6 + $0x58] sm:$0xf]
    %v516 = vld [vmem:[#allocation6 + $0x5c] sm:$0xf]
    %v517 = vld [vmem:[#allocation6 + $0x60] sm:$0xf]
    %v518 = vld [vmem:[#allocation6 + $0x64] sm:$0xf]
    %v519 = vld [vmem:[#allocation6 + $0x68] sm:$0xf]
    %v520 = vld [vmem:[#allocation6 + $0x6c] sm:$0xf]
    %v521 = vld [vmem:[#allocation6 + $0x70] sm:$0xf]
    %v522 = vld [vmem:[#allocation6 + $0x74] sm:$0xf]
    %v523 = vld [vmem:[#allocation6 + $0x78] sm:$0xf]
    %v524 = vld [vmem:[#allocation6 + $0x7c] sm:$0xf]
    %v525 = vld [vmem:[%s5 + $0x2] sm:$0x1]
    %v526 = vlaneseq
    %v527 = vshrl.u32 %v526, 7
    %v528 = vsub.s32 0, %v527
    %v529 = vrot.slane %v525, %v528
    %v562 = vunpack.c.l.b16 %v493
    %v563 = vunpack.c.l.b16 %v494
    %v564 = vunpack.c.l.b16 %v495
    %v565 = vunpack.c.l.b16 %v496
    %v566 = vunpack.c.l.b16 %v497
    %v567 = vunpack.c.l.b16 %v498
    %v568 = vunpack.c.l.b16 %v499
    %v569 = vunpack.c.l.b16 %v500
    %v570 = vunpack.c.l.b16 %v501
    %v571 = vunpack.c.l.b16 %v502
    %v572 = vunpack.c.l.b16 %v503
    %v573 = vunpack.c.l.b16 %v504
    %v574 = vunpack.c.l.b16 %v505
    %v575 = vunpack.c.l.b16 %v506
    %v576 = vunpack.c.l.b16 %v507
    %v577 = vunpack.c.l.b16 %v508
    %v578 = vunpack.c.l.b16 %v509
    %v579 = vunpack.c.l.b16 %v510
    %v580 = vunpack.c.l.b16 %v511
    %v581 = vunpack.c.l.b16 %v512
    %v582 = vunpack.c.l.b16 %v513
    %v583 = vunpack.c.l.b16 %v514
    %v584 = vunpack.c.l.b16 %v515
    %v585 = vunpack.c.l.b16 %v516
    %v586 = vunpack.c.l.b16 %v517
    %v587 = vunpack.c.l.b16 %v518
    %v588 = vunpack.c.l.b16 %v519
    %v589 = vunpack.c.l.b16 %v520
    %v590 = vunpack.c.l.b16 %v521
    %v591 = vunpack.c.l.b16 %v522
    %v592 = vunpack.c.l.b16 %v523
    %v593 = vunpack.c.l.b16 %v524
    %v594 = vpack.c.b16 %v563, %v562
    %v595 = vpack.c.b16 %v565, %v564
    %v596 = vpack.c.b16 %v567, %v566
    %v597 = vpack.c.b16 %v569, %v568
    %v598 = vpack.c.b16 %v571, %v570
    %v599 = vpack.c.b16 %v573, %v572
    %v600 = vpack.c.b16 %v575, %v574
    %v601 = vpack.c.b16 %v577, %v576
    %v602 = vpack.c.b16 %v579, %v578
    %v603 = vpack.c.b16 %v581, %v580
    %v604 = vpack.c.b16 %v583, %v582
    %v605 = vpack.c.b16 %v585, %v584
    %v606 = vpack.c.b16 %v587, %v586
    %v607 = vpack.c.b16 %v589, %v588
    %v608 = vpack.c.b16 %v591, %v590
    %v609 = vpack.c.b16 %v593, %v592
    %626 = vmatprep.subr.bf16.mxu0 0
    %627 = vmatpush1.bf16.msra.mxu0 %v594
    %628 = vmatprep.subr.bf16.mxu0 0
    %629 = vmatpush1.bf16.msra.mxu0 %v595
    %630 = vmatprep.subr.bf16.mxu0 0
    %631 = vmatpush1.bf16.msra.mxu0 %v596
    %632 = vmatprep.subr.bf16.mxu0 0
    %633 = vmatpush1.bf16.msra.mxu0 %v597
    %634 = vmatprep.subr.bf16.mxu0 0
    %635 = vmatpush1.bf16.msra.mxu0 %v598
    %636 = vmatprep.subr.bf16.mxu0 0
    %637 = vmatpush1.bf16.msra.mxu0 %v599
    %638 = vmatprep.subr.bf16.mxu0 0
    %639 = vmatpush1.bf16.msra.mxu0 %v600
    %640 = vmatprep.subr.bf16.mxu0 0
    %641 = vmatpush1.bf16.msra.mxu0 %v601
    %642 = vmatprep.subr.bf16.mxu0 0
    %643 = vmatpush1.bf16.msra.mxu0 %v602
    %644 = vmatprep.subr.bf16.mxu0 0
    %645 = vmatpush1.bf16.msra.mxu0 %v603
    %646 = vmatprep.subr.bf16.mxu0 0
    %647 = vmatpush1.bf16.msra.mxu0 %v604
    %648 = vmatprep.subr.bf16.mxu0 0
    %649 = vmatpush1.bf16.msra.mxu0 %v605
    %650 = vmatprep.subr.bf16.mxu0 0
    %651 = vmatpush1.bf16.msra.mxu0 %v606
    %652 = vmatprep.subr.bf16.mxu0 0
    %653 = vmatpush1.bf16.msra.mxu0 %v607
    %654 = vmatprep.subr.bf16.mxu0 0
    %655 = vmatpush1.bf16.msra.mxu0 %v608
    %656 = vmatprep.subr.bf16.mxu0 0
    %657 = vmatpush1.bf16.msra.mxu0 %v609
    %658 = vmatprep.mubr.bf16.mxu0 %v492
    %659 = vmatmul.mubr.bf16.gmra.mrb[0].mxu0 %v491
    %v660 = vpop.f32.mrb[0].mxu0
    %v661 = vadd.f32 %v529, %v660
    %v662 = vpop.f32.mrb[0].mxu0
    %v663 = vpop.f32.mrb[0].mxu0
    %v664 = vadd.f32 %v529, %v663
    %v665 = vpop.f32.mrb[0].mxu0
    %666 = vdwg.mxu0
    %v667 = vmax.f32 %v661, 0.0
    %v668 = vmax.f32 %v664, 0.0
    %v669 = vpack.c.bf16 %v668, %v667
    %v670 = vld [vmem:[#allocation7] sm:$0xf]
    %v671 = vld [vmem:[#allocation7 + $0x4] sm:$0xf]
    %v672 = vld [vmem:[#allocation7 + $0x8] sm:$0xf]
    %v673 = vld [vmem:[#allocation7 + $0xc] sm:$0xf]
    %v674 = vld [vmem:[#allocation7 + $0x10] sm:$0xf]
    %v675 = vld [vmem:[#allocation7 + $0x14] sm:$0xf]
    %v676 = vld [vmem:[#allocation7 + $0x18] sm:$0xf]
    %v677 = vld [vmem:[#allocation7 + $0x1c] sm:$0xf]
    %v678 = vld [vmem:[#allocation7 + $0x20] sm:$0xf]
    %v679 = vld [vmem:[#allocation7 + $0x24] sm:$0xf]
    %v680 = vld [vmem:[#allocation7 + $0x28] sm:$0xf]
    %v681 = vld [vmem:[#allocation7 + $0x2c] sm:$0xf]
    %v682 = vld [vmem:[#allocation7 + $0x30] sm:$0xf]
    %v683 = vld [vmem:[#allocation7 + $0x34] sm:$0xf]
    %v684 = vld [vmem:[#allocation7 + $0x38] sm:$0xf]
    %v685 = vld [vmem:[#allocation7 + $0x3c] sm:$0xf]
    %v686 = vld [vmem:[%s5 + $0x3] sm:$0x1]
    %v687 = vlaneseq
    %v688 = vshrl.u32 %v687, 7
    %v689 = vsub.s32 0, %v688
    %v690 = vrot.slane %v686, %v689
    %v707 = vunpack.c.l.b16 %v670
    %v708 = vunpack.c.l.b16 %v671
    %v709 = vunpack.c.l.b16 %v672
    %v710 = vunpack.c.l.b16 %v673
    %v711 = vunpack.c.l.b16 %v674
    %v712 = vunpack.c.l.b16 %v675
    %v713 = vunpack.c.l.b16 %v676
    %v714 = vunpack.c.l.b16 %v677
    %v715 = vunpack.c.l.b16 %v678
    %v716 = vunpack.c.l.b16 %v679
    %v717 = vunpack.c.l.b16 %v680
    %v718 = vunpack.c.l.b16 %v681
    %v719 = vunpack.c.l.b16 %v682
    %v720 = vunpack.c.l.b16 %v683
    %v721 = vunpack.c.l.b16 %v684
    %v722 = vunpack.c.l.b16 %v685
    %v723 = vpack.c.b16 %v708, %v707
    %v724 = vpack.c.b16 %v710, %v709
    %v725 = vpack.c.b16 %v712, %v711
    %v726 = vpack.c.b16 %v714, %v713
    %v727 = vpack.c.b16 %v716, %v715
    %v728 = vpack.c.b16 %v718, %v717
    %v729 = vpack.c.b16 %v720, %v719
    %v730 = vpack.c.b16 %v722, %v721
    %739 = vmatprep.subr.bf16.mxu0 0
    %740 = vmatpush1.bf16.msra.mxu0 %v723
    %741 = vmatprep.subr.bf16.mxu0 0
    %742 = vmatpush1.bf16.msra.mxu0 %v724
    %743 = vmatprep.subr.bf16.mxu0 0
    %744 = vmatpush1.bf16.msra.mxu0 %v725
    %745 = vmatprep.subr.bf16.mxu0 0
    %746 = vmatpush1.bf16.msra.mxu0 %v726
    %747 = vmatprep.subr.bf16.mxu0 0
    %748 = vmatpush1.bf16.msra.mxu0 %v727
    %749 = vmatprep.subr.bf16.mxu0 0
    %750 = vmatpush1.bf16.msra.mxu0 %v728
    %751 = vmatprep.subr.bf16.mxu0 0
    %752 = vmatpush1.bf16.msra.mxu0 %v729
    %753 = vmatprep.subr.bf16.mxu0 0
    %754 = vmatpush1.bf16.msra.mxu0 %v730
    %755 = vmatprep.subr.bf16.mxu0 0
    %756 = vmatpush1.bf16.msra.mxu0 0
    %757 = vmatprep.subr.bf16.mxu0 0
    %758 = vmatpush1.bf16.msra.mxu0 0
    %759 = vmatprep.subr.bf16.mxu0 0
    %760 = vmatpush1.bf16.msra.mxu0 0
    %761 = vmatprep.subr.bf16.mxu0 0
    %762 = vmatpush1.bf16.msra.mxu0 0
    %763 = vmatprep.subr.bf16.mxu0 0
    %764 = vmatpush1.bf16.msra.mxu0 0
    %765 = vmatprep.subr.bf16.mxu0 0
    %766 = vmatpush1.bf16.msra.mxu0 0
    %767 = vmatprep.subr.bf16.mxu0 0
    %768 = vmatpush1.bf16.msra.mxu0 0
    %769 = vmatprep.subr.bf16.mxu0 0
    %770 = vmatpush1.bf16.msra.mxu0 0
    %771 = vmatprep.mubr.bf16.mxu0 0
    %772 = vmatmul.mubr.bf16.gmra.mrb[0].mxu0 %v669
    %v773 = vpop.f32.mrb[0].mxu0
    %v774 = vadd.f32 %v690, %v773
    %v775 = vpop.f32.mrb[0].mxu0
    %v776 = vpop.f32.mrb[0].mxu0
    %v777 = vadd.f32 %v690, %v776
    %v778 = vpop.f32.mrb[0].mxu0
    %779 = vdwg.mxu0
    %v780 = vsub.f32 0.0, %v774
    %v781 = vsub.f32 0.0, %v777
    %v782 = vmul.f32 %v780, 1.442695
    %v783 = vpow.pop %v782
    %v784 = vmul.f32 %v781, 1.442695
    %v785 = vpow.pop %v784
    %v786 = vadd.f32 %v783, 1.0
    %v787 = vadd.f32 %v785, 1.0
    %v788 = vrcp.pop %v786
    %v789 = vrcp.pop %v787
    %v790 = vpack.c.bf16 %v789, %v788
    %v792 = vunpack.c.l.b16 %v790
    %v793 = vunpack.c.h.b16 %v790
    %v794 = vpack.c.b16 %v792, %v792
    %v795 = vpack.c.b16 %v793, %v793
    %798 = vst [vmem:[%s6] sm:$0xf] %v794
    %799 = vst [vmem:[%s6 + $0x4] sm:$0xf] %v795
    // Predicated region
    $region42: #{three_hidden_layers_forward.1} parent=1 // pred_check
      _
    $region43: #{three_hidden_layers_forward.1} parent=1 // pred_check_branch
      %801 = sbr.rel (0) target = $region45
    $region44: #{three_hidden_layers_forward.1} parent=1 // pred_region
      _
    $region45: #{three_hidden_layers_forward.1} parent=1 // pred_fallthru
      _
    // Predicated region
    $region46: #{three_hidden_layers_forward.1} parent=1 // pred_check
      _
    $region47: #{three_hidden_layers_forward.1} parent=1 // pred_check_branch
      %803 = sbr.rel (0) target = $region49
    $region48: #{three_hidden_layers_forward.1} parent=1 // pred_region
      _
    $region49: #{three_hidden_layers_forward.1} parent=1 // pred_fallthru
      _
    %804 = vsyncpa [#allocation3], 1
    %805 = vsyncpa [#allocation5], 1
    %806 = vsyncpa [#allocation8], 1

</llo_original>
